<compile_context>
chip_gen: v5e
topology: v5e:2x2
jax: 0.10.0
libtpu: 0.0.40
codegen_flags: <defaults>
</compile_context>

<pallas_src>
import jax
import jax.numpy as jnp
from jax.experimental import pallas as pl
from jax.experimental.pallas import tpu as pltpu

HIDDEN = 12          # default hidden_size of the module
BATCH = 3 * HIDDEN   # required for the (B,3H)+(3H,1) broadcast to be legal

LANE = 128           # TPU lane width
SUB = 8              # TPU sublane width (f32)

FRAC_BITS = 8
Q_SCALE = float(1 << FRAC_BITS)


def _pad_up(n, m):
    return ((n + m - 1) // m) * m


# ---- helpers used inside the kernel (pure elementwise jnp, VPU/EUP only) ----
def _quantize(x):
    # TODO(synk): quantize() definition not provided in the source; using a
    # fixed-point Q(., 8) round-to-nearest as a deterministic stand-in.
    return jnp.round(x * Q_SCALE) / Q_SCALE


def _sigmoid_approx(x):
    # TODO(synk): activation.sigmoid_approx not provided; using the standard
    # hardware "hard sigmoid" piecewise-linear approximation.
    return jnp.clip(0.25 * x + 0.5, 0.0, 1.0)


def _tanh_approx(x):
    # TODO(synk): activation.tanh_approx not provided; using hard-tanh.
    return jnp.clip(x, -1.0, 1.0)


# ---- Pallas kernel: whole GRU-cell hot path (matmul + gates) ----------------
def gru_cell_kernel(x_ref, h_ref, wih_ref, whht_ref, bih_ref, bhh_ref, o_ref):
    HP = o_ref.shape[1]          # padded hidden width (multiple of 128)

    x = x_ref[...]               # (BP, 1)
    h = h_ref[...]               # (BP, HP)   (padded columns are zero)
    bih = bih_ref[...]           # (BP, 1)    per-row bias column
    bhh = bhh_ref[...]           # (BP, 1)

    # Input path: K=1 contraction done as a VPU broadcast outer product.
    # ii[b, g*HP+j] = Q(x[b] * wih[g*H+j]);  then Q(ii + bias_row[b]).
    ii = _quantize(x * wih_ref[...])                      # (BP,1)*(1,3HP)
    ii = _quantize(ii + bih)

    # Hidden path: one pre-transposed, gate-blocked MXU matmul.
    hh = _quantize(jnp.dot(h, whht_ref[...],
                           preferred_element_type=jnp.float32))   # (BP, 3HP)
    hh = _quantize(hh + bhh)

    # Gate slices are 128-lane aligned -> free tile views, no lane shuffles.
    rt = _quantize(_sigmoid_approx(ii[:, 0:HP] + hh[:, 0:HP]))
    zt = _quantize(_sigmoid_approx(ii[:, HP:2 * HP] + hh[:, HP:2 * HP]))
    nt = _quantize(_tanh_approx(ii[:, 2 * HP:3 * HP] + rt * hh[:, 2 * HP:3 * HP]))

    o_ref[...] = _quantize((1.0 - zt) * nt + zt * h)      # lane-dense store


# ---- wrapper: layout plumbing (padding / transposes) + pallas_call ----------
def quantized_gru_cell(x, h, wih, whh, bih, bhh):
    f32 = jnp.float32
    H = whh.shape[1]
    B = x.shape[0]
    # The PyTorch (B,3H)+(3H,1) bias broadcast is only defined when B == 3H.
    assert B == 3 * H, "forward requires batch == 3 * hidden_size"

    HP = _pad_up(H, LANE)        # 128
    BP = _pad_up(B, SUB)         # 40

    x = x.astype(f32)
    h = h.astype(f32)
    wih = wih.astype(f32)
    whh = whh.astype(f32)
    bih = bih.astype(f32)
    bhh = bhh.astype(f32)

    # W_ih (3H, 1) -> lane-dense gate-blocked row (1, 3*HP).
    wih_row = jnp.pad(wih.reshape(3, H), ((0, 0), (0, HP - H))).reshape(1, 3 * HP)

    # W_hh (3H, H) -> pre-transposed gate-blocked (HP, 3*HP):
    #   whh_t[k, g*HP + j] = whh[g*H + j, k]   (zeros elsewhere)
    whh3 = jnp.transpose(whh.reshape(3, H, H), (0, 2, 1))          # (3, k, j)
    whh3 = jnp.pad(whh3, ((0, 0), (0, HP - H), (0, HP - H)))       # (3, HP, HP)
    whh_t = jnp.transpose(whh3, (1, 0, 2)).reshape(HP, 3 * HP)     # (HP, 3HP)

    # Per-row bias columns (exact equivalent of the (B,3H)+(3H,1) broadcast).
    bih_col = jnp.pad(bih.reshape(B, 1), ((0, BP - B), (0, 0)))
    bhh_col = jnp.pad(bhh.reshape(B, 1), ((0, BP - B), (0, 0)))

    x_p = jnp.pad(x, ((0, BP - B), (0, 0)))                        # (BP, 1)
    h_p = jnp.pad(h, ((0, BP - B), (0, HP - H)))                   # (BP, HP)

    vmem = pl.BlockSpec(memory_space=pltpu.MemorySpace.VMEM)
    out = pl.pallas_call(
        gru_cell_kernel,
        out_shape=jax.ShapeDtypeStruct((BP, HP), f32),
        in_specs=[vmem] * 6,
        out_specs=vmem,
    )(x_p, h_p, wih_row, whh_t, bih_col, bhh_col)

    return out[:B, :H]


# ---- pure-JAX reference (same math, no Pallas) for a sanity check -----------
def reference(x, h, wih, whh, bih, bhh):
    H = whh.shape[1]
    ii = _quantize(x @ wih.T)
    ii = _quantize(ii + bih)                 # (B,3H)+(3H,1): per-row broadcast
    hh = _quantize(h @ whh.T)
    hh = _quantize(hh + bhh)
    rt = _quantize(_sigmoid_approx(ii[:, 0:H] + hh[:, 0:H]))
    zt = _quantize(_sigmoid_approx(ii[:, H:2 * H] + hh[:, H:2 * H]))
    nt = _quantize(_tanh_approx(ii[:, 2 * H:3 * H] + rt * hh[:, 2 * H:3 * H]))
    return _quantize((1.0 - zt) * nt + zt * h)


if __name__ == "__main__":
    key = jax.random.PRNGKey(0)
    kx, kh, k1, k2, k3, k4 = jax.random.split(key, 6)

    H = HIDDEN
    x = jax.random.normal(kx, (BATCH, 1), dtype=jnp.float32)
    h0 = jax.random.normal(kh, (BATCH, H), dtype=jnp.float32)

    # deterministic parameter init (module uses torch.randn with these shapes)
    weight_ih_l0 = jax.random.normal(k1, (3 * H, 1), dtype=jnp.float32)
    weight_hh_l0 = jax.random.normal(k2, (3 * H, H), dtype=jnp.float32)
    bias_ih_l0 = jax.random.normal(k3, (3 * H, 1), dtype=jnp.float32)
    bias_hh_l0 = jax.random.normal(k4, (3 * H, 1), dtype=jnp.float32)

    out = quantized_gru_cell(x, h0, weight_ih_l0, weight_hh_l0,
                             bias_ih_l0, bias_hh_l0)
    out = jax.block_until_ready(out)

    ref = reference(x, h0, weight_ih_l0, weight_hh_l0, bias_ih_l0, bias_hh_l0)
    assert out.shape == (BATCH, H)

    # Outputs live on a 1/256 fixed-point grid; allow <= 2 LSB of slack for
    # MXU accumulation-order differences between the kernel and the XLA ref.
    max_err = float(jnp.max(jnp.abs(out - ref)))
    assert max_err <= (2.0 / 256.0) + 1e-6, f"mismatch vs reference: {max_err}"

    print("KERNEL_OK")
</pallas_src>

<mosaic_0001>
module attributes {stable_mosaic.version = 11 : i64} {
  func.func @gru_cell_kernel(%arg0: memref<40x1xf32, #tpu.memory_space<vmem>>, %arg1: memref<40x128xf32, #tpu.memory_space<vmem>>, %arg2: memref<1x384xf32, #tpu.memory_space<vmem>>, %arg3: memref<128x384xf32, #tpu.memory_space<vmem>>, %arg4: memref<40x1xf32, #tpu.memory_space<vmem>>, %arg5: memref<40x1xf32, #tpu.memory_space<vmem>>, %arg6: memref<40x128xf32, #tpu.memory_space<vmem>>) attributes {dimension_semantics = [], scalar_prefetch = 0 : i64, scratch_operands = 0 : i64, tpu.core_type = #tpu.core_type<tc>} {
    %c0 = arith.constant 0 : index
    %c0_0 = arith.constant 0 : index
    %0 = vector.load %arg0[%c0, %c0_0] : memref<40x1xf32, #tpu.memory_space<vmem>>, vector<40x1xf32>
    %c0_1 = arith.constant 0 : index
    %c0_2 = arith.constant 0 : index
    %1 = vector.load %arg1[%c0_1, %c0_2] : memref<40x128xf32, #tpu.memory_space<vmem>>, vector<40x128xf32>
    %c0_3 = arith.constant 0 : index
    %c0_4 = arith.constant 0 : index
    %2 = vector.load %arg4[%c0_3, %c0_4] : memref<40x1xf32, #tpu.memory_space<vmem>>, vector<40x1xf32>
    %c0_5 = arith.constant 0 : index
    %c0_6 = arith.constant 0 : index
    %3 = vector.load %arg5[%c0_5, %c0_6] : memref<40x1xf32, #tpu.memory_space<vmem>>, vector<40x1xf32>
    %c0_7 = arith.constant 0 : index
    %c0_8 = arith.constant 0 : index
    %4 = vector.load %arg2[%c0_7, %c0_8] : memref<1x384xf32, #tpu.memory_space<vmem>>, vector<1x384xf32>
    %5 = vector.broadcast %0 : vector<40x1xf32> to vector<40x384xf32>
    %6 = vector.broadcast %4 : vector<1x384xf32> to vector<40x384xf32>
    %7 = arith.mulf %5, %6 : vector<40x384xf32>
    %cst = arith.constant 2.560000e+02 : f32
    %8 = vector.broadcast %cst : f32 to vector<40x384xf32>
    %9 = arith.mulf %7, %8 : vector<40x384xf32>
    %10 = math.roundeven %9 : vector<40x384xf32>
    %cst_9 = arith.constant 2.560000e+02 : f32
    %11 = vector.broadcast %cst_9 : f32 to vector<40x384xf32>
    %12 = arith.divf %10, %11 : vector<40x384xf32>
    %13 = vector.broadcast %2 : vector<40x1xf32> to vector<40x384xf32>
    %14 = arith.addf %12, %13 : vector<40x384xf32>
    %cst_10 = arith.constant 2.560000e+02 : f32
    %15 = vector.broadcast %cst_10 : f32 to vector<40x384xf32>
    %16 = arith.mulf %14, %15 : vector<40x384xf32>
    %17 = math.roundeven %16 : vector<40x384xf32>
    %cst_11 = arith.constant 2.560000e+02 : f32
    %18 = vector.broadcast %cst_11 : f32 to vector<40x384xf32>
    %19 = arith.divf %17, %18 : vector<40x384xf32>
    %c0_12 = arith.constant 0 : index
    %c0_13 = arith.constant 0 : index
    %20 = vector.load %arg3[%c0_12, %c0_13] : memref<128x384xf32, #tpu.memory_space<vmem>>, vector<128x384xf32>
    %cst_14 = arith.constant dense<0.000000e+00> : vector<40x384xf32>
    %21 = tpu.matmul %1, %20, %cst_14 {dimension_numbers = #tpu.dot_dimension_numbers<[1], [0], [0], [1], [0, 0, 1, 1], [], []>} : vector<40x128xf32>, vector<128x384xf32>, vector<40x384xf32> -> vector<40x384xf32>
    %cst_15 = arith.constant 2.560000e+02 : f32
    %22 = vector.broadcast %cst_15 : f32 to vector<40x384xf32>
    %23 = arith.mulf %21, %22 : vector<40x384xf32>
    %24 = math.roundeven %23 : vector<40x384xf32>
    %cst_16 = arith.constant 2.560000e+02 : f32
    %25 = vector.broadcast %cst_16 : f32 to vector<40x384xf32>
    %26 = arith.divf %24, %25 : vector<40x384xf32>
    %27 = vector.broadcast %3 : vector<40x1xf32> to vector<40x384xf32>
    %28 = arith.addf %26, %27 : vector<40x384xf32>
    %cst_17 = arith.constant 2.560000e+02 : f32
    %29 = vector.broadcast %cst_17 : f32 to vector<40x384xf32>
    %30 = arith.mulf %28, %29 : vector<40x384xf32>
    %31 = math.roundeven %30 : vector<40x384xf32>
    %cst_18 = arith.constant 2.560000e+02 : f32
    %32 = vector.broadcast %cst_18 : f32 to vector<40x384xf32>
    %33 = arith.divf %31, %32 : vector<40x384xf32>
    %34 = vector.extract_strided_slice %19 {offsets = [0, 0], sizes = [40, 128], strides = [1, 1]} : vector<40x384xf32> to vector<40x128xf32>
    %35 = vector.extract_strided_slice %33 {offsets = [0, 0], sizes = [40, 128], strides = [1, 1]} : vector<40x384xf32> to vector<40x128xf32>
    %36 = arith.addf %34, %35 : vector<40x128xf32>
    %cst_19 = arith.constant 2.500000e-01 : f32
    %37 = vector.broadcast %cst_19 : f32 to vector<40x128xf32>
    %38 = arith.mulf %37, %36 : vector<40x128xf32>
    %cst_20 = arith.constant 5.000000e-01 : f32
    %39 = vector.broadcast %cst_20 : f32 to vector<40x128xf32>
    %40 = arith.addf %38, %39 : vector<40x128xf32>
    %cst_21 = arith.constant 0.000000e+00 : f32
    %cst_22 = arith.constant 1.000000e+00 : f32
    %41 = vector.broadcast %cst_21 : f32 to vector<40x128xf32>
    %42 = arith.maximumf %41, %40 : vector<40x128xf32>
    %43 = vector.broadcast %cst_22 : f32 to vector<40x128xf32>
    %44 = arith.minimumf %43, %42 : vector<40x128xf32>
    %cst_23 = arith.constant 2.560000e+02 : f32
    %45 = vector.broadcast %cst_23 : f32 to vector<40x128xf32>
    %46 = arith.mulf %44, %45 : vector<40x128xf32>
    %47 = math.roundeven %46 : vector<40x128xf32>
    %cst_24 = arith.constant 2.560000e+02 : f32
    %48 = vector.broadcast %cst_24 : f32 to vector<40x128xf32>
    %49 = arith.divf %47, %48 : vector<40x128xf32>
    %50 = vector.extract_strided_slice %19 {offsets = [0, 128], sizes = [40, 128], strides = [1, 1]} : vector<40x384xf32> to vector<40x128xf32>
    %51 = vector.extract_strided_slice %33 {offsets = [0, 128], sizes = [40, 128], strides = [1, 1]} : vector<40x384xf32> to vector<40x128xf32>
    %52 = arith.addf %50, %51 : vector<40x128xf32>
    %cst_25 = arith.constant 2.500000e-01 : f32
    %53 = vector.broadcast %cst_25 : f32 to vector<40x128xf32>
    %54 = arith.mulf %53, %52 : vector<40x128xf32>
    %cst_26 = arith.constant 5.000000e-01 : f32
    %55 = vector.broadcast %cst_26 : f32 to vector<40x128xf32>
    %56 = arith.addf %54, %55 : vector<40x128xf32>
    %cst_27 = arith.constant 0.000000e+00 : f32
    %cst_28 = arith.constant 1.000000e+00 : f32
    %57 = vector.broadcast %cst_27 : f32 to vector<40x128xf32>
    %58 = arith.maximumf %57, %56 : vector<40x128xf32>
    %59 = vector.broadcast %cst_28 : f32 to vector<40x128xf32>
    %60 = arith.minimumf %59, %58 : vector<40x128xf32>
    %cst_29 = arith.constant 2.560000e+02 : f32
    %61 = vector.broadcast %cst_29 : f32 to vector<40x128xf32>
    %62 = arith.mulf %60, %61 : vector<40x128xf32>
    %63 = math.roundeven %62 : vector<40x128xf32>
    %cst_30 = arith.constant 2.560000e+02 : f32
    %64 = vector.broadcast %cst_30 : f32 to vector<40x128xf32>
    %65 = arith.divf %63, %64 : vector<40x128xf32>
    %66 = vector.extract_strided_slice %19 {offsets = [0, 256], sizes = [40, 128], strides = [1, 1]} : vector<40x384xf32> to vector<40x128xf32>
    %67 = vector.extract_strided_slice %33 {offsets = [0, 256], sizes = [40, 128], strides = [1, 1]} : vector<40x384xf32> to vector<40x128xf32>
    %68 = arith.mulf %49, %67 : vector<40x128xf32>
    %69 = arith.addf %66, %68 : vector<40x128xf32>
    %cst_31 = arith.constant -1.000000e+00 : f32
    %cst_32 = arith.constant 1.000000e+00 : f32
    %70 = vector.broadcast %cst_31 : f32 to vector<40x128xf32>
    %71 = arith.maximumf %70, %69 : vector<40x128xf32>
    %72 = vector.broadcast %cst_32 : f32 to vector<40x128xf32>
    %73 = arith.minimumf %72, %71 : vector<40x128xf32>
    %cst_33 = arith.constant 2.560000e+02 : f32
    %74 = vector.broadcast %cst_33 : f32 to vector<40x128xf32>
    %75 = arith.mulf %73, %74 : vector<40x128xf32>
    %76 = math.roundeven %75 : vector<40x128xf32>
    %cst_34 = arith.constant 2.560000e+02 : f32
    %77 = vector.broadcast %cst_34 : f32 to vector<40x128xf32>
    %78 = arith.divf %76, %77 : vector<40x128xf32>
    %cst_35 = arith.constant 1.000000e+00 : f32
    %79 = vector.broadcast %cst_35 : f32 to vector<40x128xf32>
    %80 = arith.subf %79, %65 : vector<40x128xf32>
    %81 = arith.mulf %80, %78 : vector<40x128xf32>
    %82 = arith.mulf %65, %1 : vector<40x128xf32>
    %83 = arith.addf %81, %82 : vector<40x128xf32>
    %cst_36 = arith.constant 2.560000e+02 : f32
    %84 = vector.broadcast %cst_36 : f32 to vector<40x128xf32>
    %85 = arith.mulf %83, %84 : vector<40x128xf32>
    %86 = math.roundeven %85 : vector<40x128xf32>
    %cst_37 = arith.constant 2.560000e+02 : f32
    %87 = vector.broadcast %cst_37 : f32 to vector<40x128xf32>
    %88 = arith.divf %86, %87 : vector<40x128xf32>
    %c0_38 = arith.constant 0 : index
    %c0_39 = arith.constant 0 : index
    %89 = vector.load %arg6[%c0_38, %c0_39] : memref<40x128xf32, #tpu.memory_space<vmem>>, vector<40x128xf32>
    tpu.vector_store %arg6[%c0_38, %c0_39], %88 {strides = array<i32>} : memref<40x128xf32, #tpu.memory_space<vmem>>, vector<40x128xf32>,
    return
  }
}

</mosaic_0001>

<llo_original>
// kernel: tpu_custom_call.1
$region0: #{tpu_custom_call.1}
  #allocation0 [shape = 'u32[]', space=smem, size = 0x4, offset = 0x4, fixed_abs, tag = 'smem constant byte address 0x4 - core index']
  #allocation1 [shape = 'u32[72,128]{1,0:T(1,128)}', space=vmem, size = 0x9000, scoped, tag = 'internal scratch']
  %s0 = inlined_call_operand.vmem [shape: f32[40,1], index: 0, kind: input, shape index: {}]
  %s1 = inlined_call_operand.vmem [shape: f32[40,128], index: 1, kind: input, shape index: {}]
  %s2 = inlined_call_operand.vmem [shape: f32[1,384], index: 2, kind: input, shape index: {}]
  %s3 = inlined_call_operand.hbm [shape: f32[128,384], index: 3, kind: input, shape index: {}]
  %s4 = inlined_call_operand.vmem [shape: f32[40,1], index: 4, kind: input, shape index: {}]
  %s5 = inlined_call_operand.vmem [shape: f32[40,1], index: 5, kind: input, shape index: {}]
  %s6 = inlined_call_operand.hbm [shape: f32[40,128], index: 6, kind: output, shape index: {}]
  %s7 = sld [smem:[#allocation0]]
  $region38: #{tpu_custom_call.1} parent=0
    _
  %s9 = ssub.s32 1, %s7
  %s10 = scalar_select 0, %s9, %s7
  $region1: #{tpu_custom_call.1} parent=0
    #allocation2 [shape = 'u8[196608]{0}', space=vmem, size = 0x30000, scoped, tag = 'input window, operand 3, single buffered']
    #allocation3 [shape = 's32[1]{0}', space=sflag, size = 0x4, scoped, tag = 'scoped memory for tpu_custom_call.1']
    #allocation4 [shape = 's32[1]{0}', space=sflag, size = 0x4, scoped, tag = 'scoped memory for tpu_custom_call.1']
    #allocation5 [shape = 'u8[20480]{0}', space=vmem, size = 0x5000, scoped, tag = 'output window, operand 0, single buffered']
    %11 = vsyncpa [#allocation3], 0
    %12 = vsyncpa [#allocation4], 0
    // Predicated region
    $region2: #{tpu_custom_call.1} parent=1 // pred_check
      _
    $region3: #{tpu_custom_call.1} parent=1 // pred_check_branch
      %14 = sbr.rel (0) target = $region5
    $region4: #{tpu_custom_call.1} parent=1 // pred_region
      _
    $region5: #{tpu_custom_call.1} parent=1 // pred_fallthru
      _
    // Predicated region
    $region6: #{tpu_custom_call.1} parent=1 // pred_check
      _
    $region7: #{tpu_custom_call.1} parent=1 // pred_check_branch
      %16 = sbr.rel (0) target = $region9
    $region8: #{tpu_custom_call.1} parent=1 // pred_region
      _
    $region9: #{tpu_custom_call.1} parent=1 // pred_fallthru
      _
    // Predicated region
    $region10: #{tpu_custom_call.1} parent=1 // pred_check
      _
    $region11: #{tpu_custom_call.1} parent=1 // pred_check_branch
      %18 = sbr.rel (0) target = $region13
    $region12: #{tpu_custom_call.1} parent=1 // pred_region
      _
    $region13: #{tpu_custom_call.1} parent=1 // pred_fallthru
      _
    // Predicated region
    $region14: #{tpu_custom_call.1} parent=1 // pred_check
      _
    $region15: #{tpu_custom_call.1} parent=1 // pred_check_branch
      %20 = sbr.rel (0) target = $region17
    $region16: #{tpu_custom_call.1} parent=1 // pred_region
      %22 = vsyncadd [#allocation3], 0
      %s23 = sshll.u32 %s3, 4
      %s24 = int_to_ptr.hbm [resolvable:$true] %s23
      %s25 = sshll.u32 [#allocation2], 4
      %s26 = int_to_ptr.vmem [resolvable:$true] %s25
      %31 = dma.hbm_to_vmem [thread:$0]  %s24, 6144, %s26, [#allocation3], 384, 384, 24
    $region17: #{tpu_custom_call.1} parent=1 // pred_fallthru
      _
    // Predicated region
    $region18: #{tpu_custom_call.1} parent=1 // pred_check
      _
    $region19: #{tpu_custom_call.1} parent=1 // pred_check_branch
      %33 = sbr.rel (0) target = $region21
    $region20: #{tpu_custom_call.1} parent=1 // pred_region
      _
    $region21: #{tpu_custom_call.1} parent=1 // pred_fallthru
      _
    // Predicated region
    $region22: #{tpu_custom_call.1} parent=1 // pred_check
      _
    $region23: #{tpu_custom_call.1} parent=1 // pred_check_branch
      %35 = sbr.rel (0) target = $region25
    $region24: #{tpu_custom_call.1} parent=1 // pred_region
      _
    $region25: #{tpu_custom_call.1} parent=1 // pred_fallthru
      _
    // Predicated region
    $region26: #{tpu_custom_call.1} parent=1 // pred_check
      _
    $region27: #{tpu_custom_call.1} parent=1 // pred_check_branch
      %37 = sbr.rel (0) target = $region29
    $region28: #{tpu_custom_call.1} parent=1 // pred_region
      %39 = dma.done [#allocation3], 6144
    $region29: #{tpu_custom_call.1} parent=1 // pred_fallthru
      _
    %v40 = vld [vmem:[%s0] sm:$0xff]
    %v41 = vld [vmem:[%s0 + $0x8] sm:$0xff]
    %v42 = vld [vmem:[%s0 + $0x10] sm:$0xff]
    %v43 = vld [vmem:[%s0 + $0x18] sm:$0xff]
    %v44 = vld [vmem:[%s0 + $0x20] sm:$0xff]
    %v45 = vld [vmem:[%s1] sm:$0xff]
    %v46 = vld [vmem:[%s1 + $0x8] sm:$0xff]
    %v47 = vld [vmem:[%s1 + $0x10] sm:$0xff]
    %v48 = vld [vmem:[%s1 + $0x18] sm:$0xff]
    %v49 = vld [vmem:[%s1 + $0x20] sm:$0xff]
    %v50 = vld [vmem:[%s4] sm:$0xff]
    %v51 = vld [vmem:[%s4 + $0x8] sm:$0xff]
    %v52 = vld [vmem:[%s4 + $0x10] sm:$0xff]
    %v53 = vld [vmem:[%s4 + $0x18] sm:$0xff]
    %v54 = vld [vmem:[%s4 + $0x20] sm:$0xff]
    %v55 = vld [vmem:[%s5] sm:$0xff]
    %v56 = vld [vmem:[%s5 + $0x8] sm:$0xff]
    %v57 = vld [vmem:[%s5 + $0x10] sm:$0xff]
    %v58 = vld [vmem:[%s5 + $0x18] sm:$0xff]
    %v59 = vld [vmem:[%s5 + $0x20] sm:$0xff]
    %v60 = vld [vmem:[%s2] sm:$0x7]
    %62 = vset.pattern.permute.xlu0 0
    %63 = vperm.xlu0 %62, %v40
    %v64 = vpop.permute.xlu0 %63
    %67 = vset.pattern.permute.xlu0 0
    %68 = vperm.xlu0 %67, %v41
    %v69 = vpop.permute.xlu0 %68
    %72 = vset.pattern.permute.xlu0 0
    %73 = vperm.xlu0 %72, %v42
    %v74 = vpop.permute.xlu0 %73
    %77 = vset.pattern.permute.xlu0 0
    %78 = vperm.xlu0 %77, %v43
    %v79 = vpop.permute.xlu0 %78
    %82 = vset.pattern.permute.xlu0 0
    %83 = vperm.xlu0 %82, %v44
    %v84 = vpop.permute.xlu0 %83
    %v87 = vperm.slane %v60, 0
    %v88 = vperm.slane %v60, 1
    %v89 = vperm.slane %v60, 2
    %v93 = vmul.f32 %v64, %v87
    %v94 = vmul.f32 %v64, %v88
    %v95 = vmul.f32 %v64, %v89
    %v96 = vmul.f32 %v69, %v87
    %v97 = vmul.f32 %v69, %v88
    %v98 = vmul.f32 %v69, %v89
    %v99 = vmul.f32 %v74, %v87
    %v100 = vmul.f32 %v74, %v88
    %v101 = vmul.f32 %v74, %v89
    %v102 = vmul.f32 %v79, %v87
    %v103 = vmul.f32 %v79, %v88
    %v104 = vmul.f32 %v79, %v89
    %v105 = vmul.f32 %v84, %v87
    %v106 = vmul.f32 %v84, %v88
    %v107 = vmul.f32 %v84, %v89
    %v108 = vmul.f32 %v93, 256.0
    %v109 = vmul.f32 %v94, 256.0
    %v110 = vmul.f32 %v95, 256.0
    %v111 = vmul.f32 %v96, 256.0
    %v112 = vmul.f32 %v97, 256.0
    %v113 = vmul.f32 %v98, 256.0
    %v114 = vmul.f32 %v99, 256.0
    %v115 = vmul.f32 %v100, 256.0
    %v116 = vmul.f32 %v101, 256.0
    %v117 = vmul.f32 %v102, 256.0
    %v118 = vmul.f32 %v103, 256.0
    %v119 = vmul.f32 %v104, 256.0
    %v120 = vmul.f32 %v105, 256.0
    %v121 = vmul.f32 %v106, 256.0
    %v122 = vmul.f32 %v107, 256.0
    %v123 = vround.ne.pseudo %v108
    %v124 = vround.ne.pseudo %v109
    %v125 = vround.ne.pseudo %v110
    %v126 = vround.ne.pseudo %v111
    %v127 = vround.ne.pseudo %v112
    %v128 = vround.ne.pseudo %v113
    %v129 = vround.ne.pseudo %v114
    %v130 = vround.ne.pseudo %v115
    %v131 = vround.ne.pseudo %v116
    %v132 = vround.ne.pseudo %v117
    %v133 = vround.ne.pseudo %v118
    %v134 = vround.ne.pseudo %v119
    %v135 = vround.ne.pseudo %v120
    %v136 = vround.ne.pseudo %v121
    %v137 = vround.ne.pseudo %v122
    %v138 = vrcp.pop 256.0
    %v139 = vmul.f32 256.0, %v138
    %v140 = vsub.f32 1.0, %v139
    %v141 = vmul.f32 %v138, %v140
    %v142 = vadd.f32 %v138, %v141
    %vm143 = vweird.f32 %v138
    %v144 = vsel %vm143, %v138, %v142
    %v145 = vmul.f32 %v123, %v144
    %v146 = vmul.f32 %v124, %v144
    %v147 = vmul.f32 %v125, %v144
    %v148 = vmul.f32 %v126, %v144
    %v149 = vmul.f32 %v127, %v144
    %v150 = vmul.f32 %v128, %v144
    %v151 = vmul.f32 %v129, %v144
    %v152 = vmul.f32 %v130, %v144
    %v153 = vmul.f32 %v131, %v144
    %v154 = vmul.f32 %v132, %v144
    %v155 = vmul.f32 %v133, %v144
    %v156 = vmul.f32 %v134, %v144
    %v157 = vmul.f32 %v135, %v144
    %v158 = vmul.f32 %v136, %v144
    %v159 = vmul.f32 %v137, %v144
    %161 = vset.pattern.permute.xlu0 0
    %162 = vperm.xlu0 %161, %v50
    %v163 = vpop.permute.xlu0 %162
    %166 = vset.pattern.permute.xlu0 0
    %167 = vperm.xlu0 %166, %v51
    %v168 = vpop.permute.xlu0 %167
    %171 = vset.pattern.permute.xlu0 0
    %172 = vperm.xlu0 %171, %v52
    %v173 = vpop.permute.xlu0 %172
    %176 = vset.pattern.permute.xlu0 0
    %177 = vperm.xlu0 %176, %v53
    %v178 = vpop.permute.xlu0 %177
    %181 = vset.pattern.permute.xlu0 0
    %182 = vperm.xlu0 %181, %v54
    %v183 = vpop.permute.xlu0 %182
    %v185 = vadd.f32 %v145, %v163
    %v186 = vadd.f32 %v146, %v163
    %v187 = vadd.f32 %v147, %v163
    %v188 = vadd.f32 %v148, %v168
    %v189 = vadd.f32 %v149, %v168
    %v190 = vadd.f32 %v150, %v168
    %v191 = vadd.f32 %v151, %v173
    %v192 = vadd.f32 %v152, %v173
    %v193 = vadd.f32 %v153, %v173
    %v194 = vadd.f32 %v154, %v178
    %v195 = vadd.f32 %v155, %v178
    %v196 = vadd.f32 %v156, %v178
    %v197 = vadd.f32 %v157, %v183
    %v198 = vadd.f32 %v158, %v183
    %v199 = vadd.f32 %v159, %v183
    %v200 = vmul.f32 %v185, 256.0
    %v201 = vmul.f32 %v186, 256.0
    %v202 = vmul.f32 %v187, 256.0
    %v203 = vmul.f32 %v188, 256.0
    %v204 = vmul.f32 %v189, 256.0
    %v205 = vmul.f32 %v190, 256.0
    %v206 = vmul.f32 %v191, 256.0
    %v207 = vmul.f32 %v192, 256.0
    %v208 = vmul.f32 %v193, 256.0
    %v209 = vmul.f32 %v194, 256.0
    %v210 = vmul.f32 %v195, 256.0
    %v211 = vmul.f32 %v196, 256.0
    %v212 = vmul.f32 %v197, 256.0
    %v213 = vmul.f32 %v198, 256.0
    %v214 = vmul.f32 %v199, 256.0
    %v215 = vround.ne.pseudo %v200
    %v216 = vround.ne.pseudo %v201
    %v217 = vround.ne.pseudo %v202
    %v218 = vround.ne.pseudo %v203
    %v219 = vround.ne.pseudo %v204
    %v220 = vround.ne.pseudo %v205
    %v221 = vround.ne.pseudo %v206
    %v222 = vround.ne.pseudo %v207
    %v223 = vround.ne.pseudo %v208
    %v224 = vround.ne.pseudo %v209
    %v225 = vround.ne.pseudo %v210
    %v226 = vround.ne.pseudo %v211
    %v227 = vround.ne.pseudo %v212
    %v228 = vround.ne.pseudo %v213
    %v229 = vround.ne.pseudo %v214
    %v230 = vmul.f32 %v215, %v144
    %v231 = vmul.f32 %v216, %v144
    %v232 = vmul.f32 %v217, %v144
    %v233 = vmul.f32 %v218, %v144
    %v234 = vmul.f32 %v219, %v144
    %v235 = vmul.f32 %v220, %v144
    %v236 = vmul.f32 %v221, %v144
    %v237 = vmul.f32 %v222, %v144
    %v238 = vmul.f32 %v223, %v144
    %v239 = vmul.f32 %v224, %v144
    %v240 = vmul.f32 %v225, %v144
    %v241 = vmul.f32 %v226, %v144
    %v242 = vmul.f32 %v227, %v144
    %v243 = vmul.f32 %v228, %v144
    %v244 = vmul.f32 %v229, %v144
    %v245 = vld [vmem:[#allocation2] sm:$0xff]
    %v246 = vld [vmem:[#allocation2 + $0x8] sm:$0xff]
    %v247 = vld [vmem:[#allocation2 + $0x10] sm:$0xff]
    %v248 = vld [vmem:[#allocation2 + $0x18] sm:$0xff]
    %v249 = vld [vmem:[#allocation2 + $0x20] sm:$0xff]
    %v250 = vld [vmem:[#allocation2 + $0x28] sm:$0xff]
    %v251 = vld [vmem:[#allocation2 + $0x30] sm:$0xff]
    %v252 = vld [vmem:[#allocation2 + $0x38] sm:$0xff]
    %v253 = vld [vmem:[#allocation2 + $0x40] sm:$0xff]
    %v254 = vld [vmem:[#allocation2 + $0x48] sm:$0xff]
    %v255 = vld [vmem:[#allocation2 + $0x50] sm:$0xff]
    %v256 = vld [vmem:[#allocation2 + $0x58] sm:$0xff]
    %v257 = vld [vmem:[#allocation2 + $0x60] sm:$0xff]
    %v258 = vld [vmem:[#allocation2 + $0x68] sm:$0xff]
    %v259 = vld [vmem:[#allocation2 + $0x70] sm:$0xff]
    %v260 = vld [vmem:[#allocation2 + $0x78] sm:$0xff]
    %v261 = vld [vmem:[#allocation2 + $0x80] sm:$0xff]
    %v262 = vld [vmem:[#allocation2 + $0x88] sm:$0xff]
    %v263 = vld [vmem:[#allocation2 + $0x90] sm:$0xff]
    %v264 = vld [vmem:[#allocation2 + $0x98] sm:$0xff]
    %v265 = vld [vmem:[#allocation2 + $0xa0] sm:$0xff]
    %v266 = vld [vmem:[#allocation2 + $0xa8] sm:$0xff]
    %v267 = vld [vmem:[#allocation2 + $0xb0] sm:$0xff]
    %v268 = vld [vmem:[#allocation2 + $0xb8] sm:$0xff]
    %v269 = vld [vmem:[#allocation2 + $0xc0] sm:$0xff]
    %v270 = vld [vmem:[#allocation2 + $0xc8] sm:$0xff]
    %v271 = vld [vmem:[#allocation2 + $0xd0] sm:$0xff]
    %v272 = vld [vmem:[#allocation2 + $0xd8] sm:$0xff]
    %v273 = vld [vmem:[#allocation2 + $0xe0] sm:$0xff]
    %v274 = vld [vmem:[#allocation2 + $0xe8] sm:$0xff]
    %v275 = vld [vmem:[#allocation2 + $0xf0] sm:$0xff]
    %v276 = vld [vmem:[#allocation2 + $0xf8] sm:$0xff]
    %v277 = vld [vmem:[#allocation2 + $0x100] sm:$0xff]
    %v278 = vld [vmem:[#allocation2 + $0x108] sm:$0xff]
    %v279 = vld [vmem:[#allocation2 + $0x110] sm:$0xff]
    %v280 = vld [vmem:[#allocation2 + $0x118] sm:$0xff]
    %v281 = vld [vmem:[#allocation2 + $0x120] sm:$0xff]
    %v282 = vld [vmem:[#allocation2 + $0x128] sm:$0xff]
    %v283 = vld [vmem:[#allocation2 + $0x130] sm:$0xff]
    %v284 = vld [vmem:[#allocation2 + $0x138] sm:$0xff]
    %v285 = vld [vmem:[#allocation2 + $0x140] sm:$0xff]
    %v286 = vld [vmem:[#allocation2 + $0x148] sm:$0xff]
    %v287 = vld [vmem:[#allocation2 + $0x150] sm:$0xff]
    %v288 = vld [vmem:[#allocation2 + $0x158] sm:$0xff]
    %v289 = vld [vmem:[#allocation2 + $0x160] sm:$0xff]
    %v290 = vld [vmem:[#allocation2 + $0x168] sm:$0xff]
    %v291 = vld [vmem:[#allocation2 + $0x170] sm:$0xff]
    %v292 = vld [vmem:[#allocation2 + $0x178] sm:$0xff]
    %293 = vmatpush.msra.mxu0 %v290
    %294 = vmatpush.msra.mxu0 %v287
    %295 = vmatpush.msra.mxu0 %v284
    %296 = vmatpush.msra.mxu0 %v281
    %297 = vmatpush.msra.mxu0 %v278
    %298 = vmatpush.msra.mxu0 %v275
    %299 = vmatpush.msra.mxu0 %v272
    %300 = vmatpush.msra.mxu0 %v269
    %301 = vmatpush.msra.mxu0 %v266
    %302 = vmatpush.msra.mxu0 %v263
    %303 = vmatpush.msra.mxu0 %v260
    %304 = vmatpush.msra.mxu0 %v257
    %305 = vmatpush.msra.mxu0 %v254
    %306 = vmatpush.msra.mxu0 %v251
    %307 = vmatpush.msra.mxu0 %v248
    %308 = vmatpush.msra.mxu0 %v245
    %309 = vmatmul.f32.gmra.mxu0 %v45
    %v310 = vpop.f32.mrf.mxu0
    %v311 = vadd.f32 0.0, %v310
    %312 = vmatmul.f32.gmra.mxu0 %v46
    %v313 = vpop.f32.mrf.mxu0
    %v314 = vadd.f32 0.0, %v313
    %315 = vmatmul.f32.gmra.mxu0 %v47
    %v316 = vpop.f32.mrf.mxu0
    %v317 = vadd.f32 0.0, %v316
    %318 = vmatmul.f32.gmra.mxu0 %v48
    %v319 = vpop.f32.mrf.mxu0
    %v320 = vadd.f32 0.0, %v319
    %321 = vmatmul.f32.gmra.mxu0 %v49
    %v322 = vpop.f32.mrf.mxu0
    %v323 = vadd.f32 0.0, %v322
    %324 = vdwg.mxu0
    %325 = vmatpush.msra.mxu0 %v291
    %326 = vmatpush.msra.mxu0 %v288
    %327 = vmatpush.msra.mxu0 %v285
    %328 = vmatpush.msra.mxu0 %v282
    %329 = vmatpush.msra.mxu0 %v279
    %330 = vmatpush.msra.mxu0 %v276
    %331 = vmatpush.msra.mxu0 %v273
    %332 = vmatpush.msra.mxu0 %v270
    %333 = vmatpush.msra.mxu0 %v267
    %334 = vmatpush.msra.mxu0 %v264
    %335 = vmatpush.msra.mxu0 %v261
    %336 = vmatpush.msra.mxu0 %v258
    %337 = vmatpush.msra.mxu0 %v255
    %338 = vmatpush.msra.mxu0 %v252
    %339 = vmatpush.msra.mxu0 %v249
    %340 = vmatpush.msra.mxu0 %v246
    %341 = vmatmul.f32.gmra.mxu0 %v45
    %v342 = vpop.f32.mrf.mxu0
    %v343 = vadd.f32 0.0, %v342
    %344 = vmatmul.f32.gmra.mxu0 %v46
    %v345 = vpop.f32.mrf.mxu0
    %v346 = vadd.f32 0.0, %v345
    %347 = vmatmul.f32.gmra.mxu0 %v47
    %v348 = vpop.f32.mrf.mxu0
    %v349 = vadd.f32 0.0, %v348
    %350 = vmatmul.f32.gmra.mxu0 %v48
    %v351 = vpop.f32.mrf.mxu0
    %v352 = vadd.f32 0.0, %v351
    %353 = vmatmul.f32.gmra.mxu0 %v49
    %v354 = vpop.f32.mrf.mxu0
    %v355 = vadd.f32 0.0, %v354
    %356 = vdwg.mxu0
    %357 = vmatpush.msra.mxu0 %v292
    %358 = vmatpush.msra.mxu0 %v289
    %359 = vmatpush.msra.mxu0 %v286
    %360 = vmatpush.msra.mxu0 %v283
    %361 = vmatpush.msra.mxu0 %v280
    %362 = vmatpush.msra.mxu0 %v277
    %363 = vmatpush.msra.mxu0 %v274
    %364 = vmatpush.msra.mxu0 %v271
    %365 = vmatpush.msra.mxu0 %v268
    %366 = vmatpush.msra.mxu0 %v265
    %367 = vmatpush.msra.mxu0 %v262
    %368 = vmatpush.msra.mxu0 %v259
    %369 = vmatpush.msra.mxu0 %v256
    %370 = vmatpush.msra.mxu0 %v253
    %371 = vmatpush.msra.mxu0 %v250
    %372 = vmatpush.msra.mxu0 %v247
    %373 = vmatmul.f32.gmra.mxu0 %v45
    %v374 = vpop.f32.mrf.mxu0
    %v375 = vadd.f32 0.0, %v374
    %376 = vmatmul.f32.gmra.mxu0 %v46
    %v377 = vpop.f32.mrf.mxu0
    %v378 = vadd.f32 0.0, %v377
    %379 = vmatmul.f32.gmra.mxu0 %v47
    %v380 = vpop.f32.mrf.mxu0
    %v381 = vadd.f32 0.0, %v380
    %382 = vmatmul.f32.gmra.mxu0 %v48
    %v383 = vpop.f32.mrf.mxu0
    %v384 = vadd.f32 0.0, %v383
    %385 = vmatmul.f32.gmra.mxu0 %v49
    %v386 = vpop.f32.mrf.mxu0
    %v387 = vadd.f32 0.0, %v386
    %388 = vdwg.mxu0
    %v389 = vmul.f32 %v311, 256.0
    %v390 = vmul.f32 %v343, 256.0
    %v391 = vmul.f32 %v375, 256.0
    %v392 = vmul.f32 %v314, 256.0
    %v393 = vmul.f32 %v346, 256.0
    %v394 = vmul.f32 %v378, 256.0
    %v395 = vmul.f32 %v317, 256.0
    %v396 = vmul.f32 %v349, 256.0
    %v397 = vmul.f32 %v381, 256.0
    %v398 = vmul.f32 %v320, 256.0
    %v399 = vmul.f32 %v352, 256.0
    %v400 = vmul.f32 %v384, 256.0
    %v401 = vmul.f32 %v323, 256.0
    %v402 = vmul.f32 %v355, 256.0
    %v403 = vmul.f32 %v387, 256.0
    %v404 = vround.ne.pseudo %v389
    %v405 = vround.ne.pseudo %v390
    %v406 = vround.ne.pseudo %v391
    %v407 = vround.ne.pseudo %v392
    %v408 = vround.ne.pseudo %v393
    %v409 = vround.ne.pseudo %v394
    %v410 = vround.ne.pseudo %v395
    %v411 = vround.ne.pseudo %v396
    %v412 = vround.ne.pseudo %v397
    %v413 = vround.ne.pseudo %v398
    %v414 = vround.ne.pseudo %v399
    %v415 = vround.ne.pseudo %v400
    %v416 = vround.ne.pseudo %v401
    %v417 = vround.ne.pseudo %v402
    %v418 = vround.ne.pseudo %v403
    %v419 = vmul.f32 %v404, %v144
    %v420 = vmul.f32 %v405, %v144
    %v421 = vmul.f32 %v406, %v144
    %v422 = vmul.f32 %v407, %v144
    %v423 = vmul.f32 %v408, %v144
    %v424 = vmul.f32 %v409, %v144
    %v425 = vmul.f32 %v410, %v144
    %v426 = vmul.f32 %v411, %v144
    %v427 = vmul.f32 %v412, %v144
    %v428 = vmul.f32 %v413, %v144
    %v429 = vmul.f32 %v414, %v144
    %v430 = vmul.f32 %v415, %v144
    %v431 = vmul.f32 %v416, %v144
    %v432 = vmul.f32 %v417, %v144
    %v433 = vmul.f32 %v418, %v144
    %435 = vset.pattern.permute.xlu0 0
    %436 = vperm.xlu0 %435, %v55
    %v437 = vpop.permute.xlu0 %436
    %440 = vset.pattern.permute.xlu0 0
    %441 = vperm.xlu0 %440, %v56
    %v442 = vpop.permute.xlu0 %441
    %445 = vset.pattern.permute.xlu0 0
    %446 = vperm.xlu0 %445, %v57
    %v447 = vpop.permute.xlu0 %446
    %450 = vset.pattern.permute.xlu0 0
    %451 = vperm.xlu0 %450, %v58
    %v452 = vpop.permute.xlu0 %451
    %455 = vset.pattern.permute.xlu0 0
    %456 = vperm.xlu0 %455, %v59
    %v457 = vpop.permute.xlu0 %456
    %v459 = vadd.f32 %v419, %v437
    %v460 = vadd.f32 %v420, %v437
    %v461 = vadd.f32 %v421, %v437
    %v462 = vadd.f32 %v422, %v442
    %v463 = vadd.f32 %v423, %v442
    %v464 = vadd.f32 %v424, %v442
    %v465 = vadd.f32 %v425, %v447
    %v466 = vadd.f32 %v426, %v447
    %v467 = vadd.f32 %v427, %v447
    %v468 = vadd.f32 %v428, %v452
    %v469 = vadd.f32 %v429, %v452
    %v470 = vadd.f32 %v430, %v452
    %v471 = vadd.f32 %v431, %v457
    %v472 = vadd.f32 %v432, %v457
    %v473 = vadd.f32 %v433, %v457
    %v474 = vmul.f32 %v459, 256.0
    %v475 = vmul.f32 %v460, 256.0
    %v476 = vmul.f32 %v461, 256.0
    %v477 = vmul.f32 %v462, 256.0
    %v478 = vmul.f32 %v463, 256.0
    %v479 = vmul.f32 %v464, 256.0
    %v480 = vmul.f32 %v465, 256.0
    %v481 = vmul.f32 %v466, 256.0
    %v482 = vmul.f32 %v467, 256.0
    %v483 = vmul.f32 %v468, 256.0
    %v484 = vmul.f32 %v469, 256.0
    %v485 = vmul.f32 %v470, 256.0
    %v486 = vmul.f32 %v471, 256.0
    %v487 = vmul.f32 %v472, 256.0
    %v488 = vmul.f32 %v473, 256.0
    %v489 = vround.ne.pseudo %v474
    %v490 = vround.ne.pseudo %v475
    %v491 = vround.ne.pseudo %v476
    %v492 = vround.ne.pseudo %v477
    %v493 = vround.ne.pseudo %v478
    %v494 = vround.ne.pseudo %v479
    %v495 = vround.ne.pseudo %v480
    %v496 = vround.ne.pseudo %v481
    %v497 = vround.ne.pseudo %v482
    %v498 = vround.ne.pseudo %v483
    %v499 = vround.ne.pseudo %v484
    %v500 = vround.ne.pseudo %v485
    %v501 = vround.ne.pseudo %v486
    %v502 = vround.ne.pseudo %v487
    %v503 = vround.ne.pseudo %v488
    %v504 = vmul.f32 %v489, %v144
    %v505 = vmul.f32 %v490, %v144
    %v506 = vmul.f32 %v491, %v144
    %v507 = vmul.f32 %v492, %v144
    %v508 = vmul.f32 %v493, %v144
    %v509 = vmul.f32 %v494, %v144
    %v510 = vmul.f32 %v495, %v144
    %v511 = vmul.f32 %v496, %v144
    %v512 = vmul.f32 %v497, %v144
    %v513 = vmul.f32 %v498, %v144
    %v514 = vmul.f32 %v499, %v144
    %v515 = vmul.f32 %v500, %v144
    %v516 = vmul.f32 %v501, %v144
    %v517 = vmul.f32 %v502, %v144
    %v518 = vmul.f32 %v503, %v144
    %v519 = vadd.f32 %v230, %v504
    %v520 = vadd.f32 %v233, %v507
    %v521 = vadd.f32 %v236, %v510
    %v522 = vadd.f32 %v239, %v513
    %v523 = vadd.f32 %v242, %v516
    %v524 = vmul.f32 %v519, 0.25
    %v525 = vmul.f32 %v520, 0.25
    %v526 = vmul.f32 %v521, 0.25
    %v527 = vmul.f32 %v522, 0.25
    %v528 = vmul.f32 %v523, 0.25
    %v529 = vadd.f32 %v524, 0.5
    %v530 = vadd.f32 %v525, 0.5
    %v531 = vadd.f32 %v526, 0.5
    %v532 = vadd.f32 %v527, 0.5
    %v533 = vadd.f32 %v528, 0.5
    %v534 = vmax.f32 %v529, 0.0
    %v535 = vmax.f32 %v530, 0.0
    %v536 = vmax.f32 %v531, 0.0
    %v537 = vmax.f32 %v532, 0.0
    %v538 = vmax.f32 %v533, 0.0
    %v539 = vmin.f32 %v534, 1.0
    %v540 = vmin.f32 %v535, 1.0
    %v541 = vmin.f32 %v536, 1.0
    %v542 = vmin.f32 %v537, 1.0
    %v543 = vmin.f32 %v538, 1.0
    %v544 = vmul.f32 %v539, 256.0
    %v545 = vmul.f32 %v540, 256.0
    %v546 = vmul.f32 %v541, 256.0
    %v547 = vmul.f32 %v542, 256.0
    %v548 = vmul.f32 %v543, 256.0
    %v549 = vround.ne.pseudo %v544
    %v550 = vround.ne.pseudo %v545
    %v551 = vround.ne.pseudo %v546
    %v552 = vround.ne.pseudo %v547
    %v553 = vround.ne.pseudo %v548
    %v554 = vmul.f32 %v549, %v144
    %v555 = vmul.f32 %v550, %v144
    %v556 = vmul.f32 %v551, %v144
    %v557 = vmul.f32 %v552, %v144
    %v558 = vmul.f32 %v553, %v144
    %v559 = vadd.f32 %v231, %v505
    %v560 = vadd.f32 %v234, %v508
    %v561 = vadd.f32 %v237, %v511
    %v562 = vadd.f32 %v240, %v514
    %v563 = vadd.f32 %v243, %v517
    %v564 = vmul.f32 %v559, 0.25
    %v565 = vmul.f32 %v560, 0.25
    %v566 = vmul.f32 %v561, 0.25
    %v567 = vmul.f32 %v562, 0.25
    %v568 = vmul.f32 %v563, 0.25
    %v569 = vadd.f32 %v564, 0.5
    %v570 = vadd.f32 %v565, 0.5
    %v571 = vadd.f32 %v566, 0.5
    %v572 = vadd.f32 %v567, 0.5
    %v573 = vadd.f32 %v568, 0.5
    %v574 = vmax.f32 %v569, 0.0
    %v575 = vmax.f32 %v570, 0.0
    %v576 = vmax.f32 %v571, 0.0
    %v577 = vmax.f32 %v572, 0.0
    %v578 = vmax.f32 %v573, 0.0
    %v579 = vmin.f32 %v574, 1.0
    %v580 = vmin.f32 %v575, 1.0
    %v581 = vmin.f32 %v576, 1.0
    %v582 = vmin.f32 %v577, 1.0
    %v583 = vmin.f32 %v578, 1.0
    %v584 = vmul.f32 %v579, 256.0
    %v585 = vmul.f32 %v580, 256.0
    %v586 = vmul.f32 %v581, 256.0
    %v587 = vmul.f32 %v582, 256.0
    %v588 = vmul.f32 %v583, 256.0
    %v589 = vround.ne.pseudo %v584
    %v590 = vround.ne.pseudo %v585
    %v591 = vround.ne.pseudo %v586
    %v592 = vround.ne.pseudo %v587
    %v593 = vround.ne.pseudo %v588
    %v594 = vmul.f32 %v589, %v144
    %v595 = vmul.f32 %v590, %v144
    %v596 = vmul.f32 %v591, %v144
    %v597 = vmul.f32 %v592, %v144
    %v598 = vmul.f32 %v593, %v144
    %v599 = vmul.f32 %v554, %v506
    %v600 = vmul.f32 %v555, %v509
    %v601 = vmul.f32 %v556, %v512
    %v602 = vmul.f32 %v557, %v515
    %v603 = vmul.f32 %v558, %v518
    %v604 = vadd.f32 %v232, %v599
    %v605 = vadd.f32 %v235, %v600
    %v606 = vadd.f32 %v238, %v601
    %v607 = vadd.f32 %v241, %v602
    %v608 = vadd.f32 %v244, %v603
    %v609 = vmax.f32 %v604, -1.0
    %v610 = vmax.f32 %v605, -1.0
    %v611 = vmax.f32 %v606, -1.0
    %v612 = vmax.f32 %v607, -1.0
    %v613 = vmax.f32 %v608, -1.0
    %v614 = vmin.f32 %v609, 1.0
    %v615 = vmin.f32 %v610, 1.0
    %v616 = vmin.f32 %v611, 1.0
    %v617 = vmin.f32 %v612, 1.0
    %v618 = vmin.f32 %v613, 1.0
    %v619 = vmul.f32 %v614, 256.0
    %v620 = vmul.f32 %v615, 256.0
    %v621 = vmul.f32 %v616, 256.0
    %v622 = vmul.f32 %v617, 256.0
    %v623 = vmul.f32 %v618, 256.0
    %v624 = vround.ne.pseudo %v619
    %v625 = vround.ne.pseudo %v620
    %v626 = vround.ne.pseudo %v621
    %v627 = vround.ne.pseudo %v622
    %v628 = vround.ne.pseudo %v623
    %v629 = vmul.f32 %v624, %v144
    %v630 = vmul.f32 %v625, %v144
    %v631 = vmul.f32 %v626, %v144
    %v632 = vmul.f32 %v627, %v144
    %v633 = vmul.f32 %v628, %v144
    %v634 = vsub.f32 1.0, %v594
    %v635 = vsub.f32 1.0, %v595
    %v636 = vsub.f32 1.0, %v596
    %v637 = vsub.f32 1.0, %v597
    %v638 = vsub.f32 1.0, %v598
    %v639 = vmul.f32 %v634, %v629
    %v640 = vmul.f32 %v635, %v630
    %v641 = vmul.f32 %v636, %v631
    %v642 = vmul.f32 %v637, %v632
    %v643 = vmul.f32 %v638, %v633
    %v644 = vmul.f32 %v594, %v45
    %v645 = vmul.f32 %v595, %v46
    %v646 = vmul.f32 %v596, %v47
    %v647 = vmul.f32 %v597, %v48
    %v648 = vmul.f32 %v598, %v49
    %v649 = vadd.f32 %v639, %v644
    %v650 = vadd.f32 %v640, %v645
    %v651 = vadd.f32 %v641, %v646
    %v652 = vadd.f32 %v642, %v647
    %v653 = vadd.f32 %v643, %v648
    %v654 = vmul.f32 %v649, 256.0
    %v655 = vmul.f32 %v650, 256.0
    %v656 = vmul.f32 %v651, 256.0
    %v657 = vmul.f32 %v652, 256.0
    %v658 = vmul.f32 %v653, 256.0
    %v659 = vround.ne.pseudo %v654
    %v660 = vround.ne.pseudo %v655
    %v661 = vround.ne.pseudo %v656
    %v662 = vround.ne.pseudo %v657
    %v663 = vround.ne.pseudo %v658
    %v664 = vmul.f32 %v659, %v144
    %v665 = vmul.f32 %v660, %v144
    %v666 = vmul.f32 %v661, %v144
    %v667 = vmul.f32 %v662, %v144
    %v668 = vmul.f32 %v663, %v144
    %669 = vst [vmem:[#allocation5] sm:$0xff] %v664
    %670 = vst [vmem:[#allocation5 + $0x8] sm:$0xff] %v665
    %671 = vst [vmem:[#allocation5 + $0x10] sm:$0xff] %v666
    %672 = vst [vmem:[#allocation5 + $0x18] sm:$0xff] %v667
    %673 = vst [vmem:[#allocation5 + $0x20] sm:$0xff] %v668
    // Predicated region
    $region30: #{tpu_custom_call.1} parent=1 // pred_check
      _
    $region31: #{tpu_custom_call.1} parent=1 // pred_check_branch
      %675 = sbr.rel (0) target = $region33
    $region32: #{tpu_custom_call.1} parent=1 // pred_region
      %677 = vsyncadd [#allocation4], 0
      %s678 = sshll.u32 [#allocation5], 4
      %s679 = int_to_ptr.vmem [resolvable:$true] %s678
      %s680 = sshll.u32 %s6, 4
      %s681 = int_to_ptr.hbm [resolvable:$true] %s680
      %686 = dma.vmem_to_hbm [thread:$0]  %s679, 640, %s681, [#allocation4], 128, 128, 8
    $region33: #{tpu_custom_call.1} parent=1 // pred_fallthru
      _
    // Predicated region
    $region34: #{tpu_custom_call.1} parent=1 // pred_check
      _
    $region35: #{tpu_custom_call.1} parent=1 // pred_check_branch
      %688 = sbr.rel (0) target = $region37
    $region36: #{tpu_custom_call.1} parent=1 // pred_region
      %690 = dma.done [#allocation4], 640
    $region37: #{tpu_custom_call.1} parent=1 // pred_fallthru
      _
    %691 = vsyncpa [#allocation3], 1
    %692 = vsyncpa [#allocation4], 1

</llo_original>
